<compile_context>
chip_gen: v7x
topology: tpu7x:2x2x1
jax: 0.10.0
libtpu: 0.0.40
codegen_flags: <defaults>
</compile_context>

<pallas_src>
import jax
import jax.numpy as jnp
from jax.experimental import pallas as pl
from jax.experimental.pallas import tpu as pltpu

_LANES = 128
# sublane multiple required for the second-minor block dim, per itemsize
_SUBLANE_MULT = {4: 8, 2: 16, 1: 32}


def _round_up(v, m):
    return ((v + m - 1) // m) * m


def _lgf_kernel(y_ref, o_ref):
    # On the flattened, lane-dense view: (y @ A)_flat = -2*y_flat - pair_swap(y_flat)
    # where pair_swap exchanges each even/odd lane pair (y1, y2).
    y = y_ref[...].astype(jnp.float32)                    # (tile_rows, 128)
    nxt = pltpu.roll(y, _LANES - 1, axis=1)               # == shift -1: lane i <- y[i+1]  (XLU)
    prv = pltpu.roll(y, 1, axis=1)                        # lane i <- y[i-1]               (XLU)
    lane = jax.lax.broadcasted_iota(jnp.int32, y.shape, 1)
    is_even = (lane & 1) == 0
    swapped = jnp.where(is_even, nxt, prv)                # partner within each pair
    # A = [[-2, -1], [-1, -2]]  =>  out_flat = -2*y_flat - swapped  (pure VPU)
    o_ref[...] = (-2.0 * y - swapped).astype(o_ref.dtype)


def _lgf_fallback(y):
    # Single fused-XLA pass; same math and same output dtype as the kernel.
    y32 = y.astype(jnp.float32)
    return (-2.0 * y32 - y32[:, ::-1]).astype(y.dtype)


def lgf_forward(t, y, *, block_rows=2048, min_rows_for_pallas=2048):
    """Pallas implementation of LGF.forward(t, y) = y @ [[-2,-1],[-1,-2]].

    t is unused (kept for signature parity with the PyTorch module).
    y: (N, 2) float array.  Output has the same dtype as y on both paths.
    """
    del t
    n = y.shape[0]
    total = 2 * n
    itemsize = jnp.dtype(y.dtype).itemsize
    sub = _SUBLANE_MULT.get(itemsize, 8)

    # Take the Pallas path only when it is copy-free (the row-major flatten
    # reshapes exactly to (rows, 128)) and large enough to amortize launch
    # overhead; otherwise one fused-XLA pass is strictly better.
    if (total % _LANES != 0) or (total // _LANES < min_rows_for_pallas):
        return _lgf_fallback(y)

    rows = total // _LANES
    flat2d = y.reshape(rows, _LANES)                      # free row-major view

    # Tile sizing: round block_rows up to the sublane multiple, keep >= 2 grid
    # steps when possible (so v7x's two TensorCores both get work), never
    # exceed the (rounded) row count.  Ragged last block is handled by Pallas.
    tile_rows = _round_up(block_rows, sub)
    if rows >= 2 * sub:
        tile_rows = min(tile_rows, max(sub, _round_up(pl.cdiv(rows, 2), sub)))
    tile_rows = min(tile_rows, _round_up(rows, sub))
    grid = pl.cdiv(rows, tile_rows)

    out2d = pl.pallas_call(
        _lgf_kernel,
        out_shape=jax.ShapeDtypeStruct((rows, _LANES), y.dtype),
        grid_spec=pl.GridSpec(
            grid=(grid,),
            in_specs=[pl.BlockSpec((tile_rows, _LANES), lambda i: (i, 0))],
            out_specs=pl.BlockSpec((tile_rows, _LANES), lambda i: (i, 0)),
        ),
        compiler_params=pltpu.CompilerParams(
            dimension_semantics=("parallel",),            # megacore / v7x 2-TC split
        ),
        cost_estimate=pl.CostEstimate(
            flops=2 * total,
            transcendentals=0,
            bytes_accessed=2 * rows * _LANES * itemsize,
        ),
    )(flat2d)

    return out2d.reshape(n, 2)


if __name__ == "__main__":
    A = jnp.array([[-2.0, -1.0], [-1.0, -2.0]], dtype=jnp.float32)
    t = jnp.float32(0.0)

    # 1) Pallas path, divisible grid: N=1024 -> flat (16, 128), 2 grid steps.
    y = jax.random.normal(jax.random.PRNGKey(0), (1024, 2), dtype=jnp.float32)
    out = lgf_forward(t, y, block_rows=8, min_rows_for_pallas=8)
    jax.block_until_ready(out)
    assert out.shape == (1024, 2) and out.dtype == jnp.float32
    assert jnp.allclose(out, y @ A, atol=1e-6, rtol=1e-6), "pallas path mismatch"

    # 2) Pallas path, ragged final block: N=1088 -> flat (17, 128), grid of 2.
    y_r = jax.random.normal(jax.random.PRNGKey(1), (1088, 2), dtype=jnp.float32)
    out_r = lgf_forward(t, y_r, min_rows_for_pallas=8)
    jax.block_until_ready(out_r)
    assert jnp.allclose(out_r, y_r @ A, atol=1e-6, rtol=1e-6), "ragged grid mismatch"

    # 3) Native bf16 through the Pallas path (no wrapper convert kernel).
    y_bf = jax.random.normal(jax.random.PRNGKey(2), (1024, 2), dtype=jnp.bfloat16)
    out_bf = lgf_forward(t, y_bf, min_rows_for_pallas=8)
    jax.block_until_ready(out_bf)
    ref_bf = (y_bf.astype(jnp.float32) @ A).astype(jnp.bfloat16)
    assert out_bf.dtype == jnp.bfloat16
    assert jnp.allclose(out_bf.astype(jnp.float32), ref_bf.astype(jnp.float32),
                        atol=3e-2, rtol=3e-2), "bf16 mismatch"

    # 4) Tiny-batch fallback (no kernel launch), same dtype/semantics.
    y_s = jax.random.normal(jax.random.PRNGKey(3), (8, 2), dtype=jnp.float32)
    out_s = lgf_forward(t, y_s)
    jax.block_until_ready(out_s)
    assert jnp.allclose(out_s, y_s @ A, atol=1e-6, rtol=1e-6), "fallback mismatch"

    print("KERNEL_OK")
</pallas_src>

<mosaic_0001>
module attributes {stable_mosaic.version = 11 : i64} {
  func.func @_lgf_kernel(%arg0: i32, %arg1: memref<8x128xf32, #tpu.memory_space<vmem>>, %arg2: memref<8x128xf32, #tpu.memory_space<vmem>>) attributes {dimension_semantics = [#tpu.dimension_semantics<parallel>], iteration_bounds = array<i64: 2>, scalar_prefetch = 0 : i64, scratch_operands = 0 : i64, tpu.core_type = #tpu.core_type<tc>, window_params = [{transform_indices = @transform_0, window_bounds = array<i64: 8, 128>}, {transform_indices = @transform_1, window_bounds = array<i64: 8, 128>}]} {
    %c0 = arith.constant 0 : index
    %c0_0 = arith.constant 0 : index
    %0 = vector.load %arg1[%c0, %c0_0] : memref<8x128xf32, #tpu.memory_space<vmem>>, vector<8x128xf32>
    %c127_i32 = arith.constant 127 : i32
    %1 = tpu.dynamic_rotate %0 by %c127_i32 dim 1 : vector<8x128xf32>, i32 -> vector<8x128xf32>
    %c1_i32 = arith.constant 1 : i32
    %2 = tpu.dynamic_rotate %0 by %c1_i32 dim 1 : vector<8x128xf32>, i32 -> vector<8x128xf32>
    %3 = tpu.iota {dimensions = array<i32: 1>} : vector<8x128xi32>
    %c1_i32_1 = arith.constant 1 : i32
    %4 = vector.broadcast %c1_i32_1 : i32 to vector<8x128xi32>
    %5 = arith.andi %3, %4 : vector<8x128xi32>
    %c0_i32 = arith.constant 0 : i32
    %6 = vector.broadcast %c0_i32 : i32 to vector<8x128xi32>
    %7 = arith.cmpi eq, %5, %6 : vector<8x128xi32>
    %8 = arith.select %7, %1, %2 : vector<8x128xi1>, vector<8x128xf32>
    %cst = arith.constant -2.000000e+00 : f32
    %9 = vector.broadcast %cst : f32 to vector<8x128xf32>
    %10 = arith.mulf %9, %0 : vector<8x128xf32>
    %11 = arith.subf %10, %8 : vector<8x128xf32>
    %c0_2 = arith.constant 0 : index
    %c0_3 = arith.constant 0 : index
    %12 = vector.load %arg2[%c0_2, %c0_3] : memref<8x128xf32, #tpu.memory_space<vmem>>, vector<8x128xf32>
    tpu.vector_store %arg2[%c0_2, %c0_3], %11 {strides = array<i32>} : memref<8x128xf32, #tpu.memory_space<vmem>>, vector<8x128xf32>,
    return
  }
  func.func @transform_0(%arg0: i32) -> (i32, i32) {
    %c0_i32 = arith.constant 0 : i32
    %c0_i32_0 = arith.constant 0 : i32
    return %arg0, %c0_i32 : i32, i32
  }
  func.func @transform_1(%arg0: i32) -> (i32, i32) {
    %c0_i32 = arith.constant 0 : i32
    %c0_i32_0 = arith.constant 0 : i32
    return %arg0, %c0_i32 : i32, i32
  }
}

</mosaic_0001>

<llo_original>
// kernel: tpu_custom_call.1
$region0: #{tpu_custom_call.1}
  #allocation0 [shape = 'u32[]', space=smem, size = 0x4, offset = 0x4, fixed_abs, tag = 'smem constant byte address 0x4 - core index']
  #allocation1 [shape = 'u32[144,128]{1,0:T(1,128)}', space=vmem, size = 0x12000, scoped, tag = 'internal scratch']
  %s0 = inlined_call_operand.hbm [shape: f32[16,128], index: 0, kind: input, shape index: {}]
  %s1 = inlined_call_operand.hbm [shape: f32[16,128], index: 1, kind: output, shape index: {}]
  %s2 = sld [smem:[#allocation0]]
  $region41: #{tpu_custom_call.1} parent=0
    _
  %s4 = ssub.s32 1, %s2
  %s5 = scalar_select 0, %s4, %s2
  $region1: #{tpu_custom_call.1} parent=0
    #allocation2 [shape = 'u8[8192]{0}', space=vmem, size = 0x2000, scoped, tag = 'input window, operand 0']
    #allocation3 [shape = 's32[2]{0}', space=sflag, size = 0x8, scoped, tag = 'scoped memory for tpu_custom_call.1']
    #allocation4 [shape = 's32[2]{0}', space=sflag, size = 0x8, scoped, tag = 'scoped memory for tpu_custom_call.1']
    #allocation5 [shape = 'u8[8192]{0}', space=vmem, size = 0x2000, scoped, tag = 'output window, operand 0']
    %6 = vsyncpa [#allocation3], 0
    %s7 = scalar_lea.sflag [#allocation3], 1
    %8 = vsyncpa %s7, 0
    %9 = vsyncpa [#allocation4], 0
    %s10 = scalar_lea.sflag [#allocation4], 1
    %11 = vsyncpa %s10, 0
    loop: start=0, step=1, limit=4
    $region2: #{tpu_custom_call.1} parent=1 // loop_pre_header
      _
    $region3: #{tpu_custom_call.1} parent=1 // loop_header
      %s13 = sphi 0, %s17
      %p14 = scmp.ge.s32.totalorder %s13, 4
      %s23 = sphi 0, %s25
      %s26 = sphi 0, %s23
      %s27 = sphi 0, %s26
      %s43 = sphi 0, %s27
      %s49 = sphi 0, %s51
      %s52 = sphi 0, %s49
      %s53 = sphi 0, %s52
      %s69 = sphi 0, %s53
    $region4: #{tpu_custom_call.1} parent=1 // loop_header_branch
      %16 = sbr.rel (%p14) target = $region8
    $region5: #{tpu_custom_call.1} parent=1 // loop_body
      %s18 = ssub.s32 %s13, 1
      %s19 = ssub.s32 %s13, 2
      %s20 = sadd.s32 %s13, 1
      %s21 = ssub.s32 %s13, %s20
      %p22 = scmp.eq.s32.totalorder %s21, 0
      %s24 = sadd.s32 %s23, 1
      %s25 = scalar_select %p22, %s23, %s24
      %p28 = pneg %p22
      %p29 = scmp.eq.s32.totalorder %s13, 1
      %p30 = por %p28, %p29
      %p31 = scmp.ne.s32.totalorder %s23, %s26
      %p32 = scmp.eq.s32.totalorder %s13, 0
      %p33 = por %p31, %p32
      %p34 = scmp.ne.s32.totalorder %s23, %s26
      %p35 = scmp.eq.s32.totalorder %s18, 1
      %p36 = por %p34, %p35
      %p37 = scmp.ne.s32.totalorder %s26, %s27
      %p38 = scmp.eq.s32.totalorder %s18, 0
      %p39 = por %p37, %p38
      %p40 = scmp.ne.s32.totalorder %s26, %s27
      %p41 = scmp.eq.s32.totalorder %s19, 1
      %p42 = por %p40, %p41
      %p44 = scmp.ne.s32.totalorder %s27, %s43
      %p45 = scmp.eq.s32.totalorder %s19, 0
      %p46 = por %p44, %p45
      %s47 = ssub.s32 %s13, %s20
      %p48 = scmp.eq.s32.totalorder %s47, 0
      %s50 = sadd.s32 %s49, 1
      %s51 = scalar_select %p48, %s49, %s50
      %p54 = pneg %p48
      %p55 = scmp.eq.s32.totalorder %s13, 1
      %p56 = por %p54, %p55
      %p57 = scmp.ne.s32.totalorder %s49, %s52
      %p58 = scmp.eq.s32.totalorder %s13, 0
      %p59 = por %p57, %p58
      %p60 = scmp.ne.s32.totalorder %s49, %s52
      %p61 = scmp.eq.s32.totalorder %s18, 1
      %p62 = por %p60, %p61
      %p63 = scmp.ne.s32.totalorder %s52, %s53
      %p64 = scmp.eq.s32.totalorder %s18, 0
      %p65 = por %p63, %p64
      %p66 = scmp.ne.s32.totalorder %s52, %s53
      %p67 = scmp.eq.s32.totalorder %s19, 1
      %p68 = por %p66, %p67
      %p70 = scmp.ne.s32.totalorder %s53, %s69
      %p71 = scmp.eq.s32.totalorder %s19, 0
      %p72 = por %p70, %p71
      %p73 = scmp.le.s32.totalorder 1, %s13
      %p74 = scmp.lt.s32.totalorder %s13, 3
      %p75 = pnand %p73, %p74
      %p76 = pneg %p75
      // Predicated region
      $region9: #{tpu_custom_call.1} parent=5 // pred_check
        _
      $region10: #{tpu_custom_call.1} parent=5 // pred_check_branch
        %78 = sbr.rel (%p75) target = $region12
      $region11: #{tpu_custom_call.1} parent=5 // pred_region
        %s79 = ssub.s32 %s13, 1
      $region12: #{tpu_custom_call.1} parent=5 // pred_fallthru
        _
      %p80 = scmp.lt.s32.totalorder %s13, 2
      // Predicated region
      $region13: #{tpu_custom_call.1} parent=5 // pred_check
        %p81 = pneg %p80
      $region14: #{tpu_custom_call.1} parent=5 // pred_check_branch
        %83 = sbr.rel (%p81) target = $region16
      $region15: #{tpu_custom_call.1} parent=5 // pred_region
        // Predicated region
        $region17: #{tpu_custom_call.1} parent=15 // pred_check
          %p84 = pneg %p33
        $region18: #{tpu_custom_call.1} parent=15 // pred_check_branch
          %86 = sbr.rel (%p84) target = $region20
        $region19: #{tpu_custom_call.1} parent=15 // pred_region
          %s87 = sand.u32 %s23, 1
          %s88 = scalar_lea.sflag [#allocation3], %s87
          %s89 = sand.u32 %s23, 1
          %s90 = smul.addr %s89, 8
          %s91 = scalar_lea.vmem [#allocation2], %s90
          %s93 = ssub.s32 128, 128
          %94 = vsyncadd %s88, %s93
          %s95 = smul.addr %s13, 128
          %s96 = scalar_lea.hbm %s0, %s95
          %s98 = sshll.u32 %s91, 4
          %s99 = int_to_ptr.vmem [resolvable:$true] %s98
          %101 = dma.hbm_to_vmem [thread:$0]  %s96, 128, %s99, %s88
        $region20: #{tpu_custom_call.1} parent=15 // pred_fallthru
          _
      $region16: #{tpu_custom_call.1} parent=5 // pred_fallthru
        _
      %p102 = scmp.le.s32.totalorder 1, %s13
      %p103 = scmp.lt.s32.totalorder %s13, 3
      %p104 = pnand %p102, %p103
      %p105 = pneg %p104
      // Predicated region
      $region21: #{tpu_custom_call.1} parent=5 // pred_check
        _
      $region22: #{tpu_custom_call.1} parent=5 // pred_check_branch
        %107 = sbr.rel (%p104) target = $region24
      $region23: #{tpu_custom_call.1} parent=5 // pred_region
        %s108 = ssub.s32 %s13, 1
        %s109 = sand.u32 %s26, 1
        %s110 = scalar_lea.sflag [#allocation3], %s109
        %s111 = sand.u32 %s26, 1
        %s112 = smul.addr %s111, 8
        %s113 = scalar_lea.vmem [#allocation2], %s112
        // Predicated region
        $region25: #{tpu_custom_call.1} parent=23 // pred_check
          %p114 = pneg %p39
        $region26: #{tpu_custom_call.1} parent=23 // pred_check_branch
          %116 = sbr.rel (%p114) target = $region28
        $region27: #{tpu_custom_call.1} parent=23 // pred_region
          %117 = dma.done %s110, 128
        $region28: #{tpu_custom_call.1} parent=23 // pred_fallthru
          _
        %s118 = sand.u32 %s26, 1
        %s119 = scalar_lea.sflag [#allocation3], %s118
        %s120 = sand.u32 %s26, 1
        %s121 = smul.addr %s120, 8
        %s122 = scalar_lea.vmem [#allocation2], %s121
        %p123 = pneg %p39
        %p124 = pneg %p36
        %p125 = pneg %p65
        %p126 = pneg %p62
        %s127 = sand.u32 %s52, 1
        %s128 = scalar_lea.sflag [#allocation4], %s127
        %s129 = sand.u32 %s52, 1
        %s130 = smul.addr %s129, 8
        %s131 = scalar_lea.vmem [#allocation5], %s130
        %v132 = vld [vmem:[%s113] sm:$0xff]
        %133 = vrot.lane.b32.xlu0 %v132, 127
        %v134 = vpop.permute.xlu0 %133
        %135 = vrot.lane.b32.xlu0 %v132, 1
        %v136 = vpop.permute.xlu0 %135
        %v137 = vlaneseq
        %v138 = vand.u32 %v137, 127
        %v139 = vand.u32 %v138, 1
        %vm140 = vcmp.eq.s32.totalorder %v139, 0
        %v141 = vsel %vm140, %v134, %v136
        %v142 = vmul.f32 %v132, -2.0
        %v143 = vsub.f32 %v142, %v141
        %144 = vst [vmem:[%s131] sm:$0xff] %v143
        %s145 = sand.u32 %s52, 1
        %s146 = scalar_lea.sflag [#allocation4], %s145
        %s147 = sand.u32 %s52, 1
        %s148 = smul.addr %s147, 8
        %s149 = scalar_lea.vmem [#allocation5], %s148
        // Predicated region
        $region29: #{tpu_custom_call.1} parent=23 // pred_check
          %p150 = pneg %p62
        $region30: #{tpu_custom_call.1} parent=23 // pred_check_branch
          %152 = sbr.rel (%p150) target = $region32
        $region31: #{tpu_custom_call.1} parent=23 // pred_region
          %s154 = ssub.s32 128, 128
          %155 = vsyncadd %s146, %s154
          %s156 = smul.addr %s18, 128
          %s157 = scalar_lea.hbm %s1, %s156
          %s159 = sshll.u32 %s149, 4
          %s160 = int_to_ptr.vmem [resolvable:$true] %s159
          %162 = dma.vmem_to_hbm [thread:$0]  %s160, 128, %s157, %s146
        $region32: #{tpu_custom_call.1} parent=23 // pred_fallthru
          _
      $region24: #{tpu_custom_call.1} parent=5 // pred_fallthru
        _
      %p163 = scmp.le.s32.totalorder 2, %s13
      // Predicated region
      $region33: #{tpu_custom_call.1} parent=5 // pred_check
        %p164 = pneg %p163
      $region34: #{tpu_custom_call.1} parent=5 // pred_check_branch
        %166 = sbr.rel (%p164) target = $region36
      $region35: #{tpu_custom_call.1} parent=5 // pred_region
        %s167 = ssub.s32 %s13, 2
        // Predicated region
        $region37: #{tpu_custom_call.1} parent=35 // pred_check
          %p168 = pneg %p68
        $region38: #{tpu_custom_call.1} parent=35 // pred_check_branch
          %170 = sbr.rel (%p168) target = $region40
        $region39: #{tpu_custom_call.1} parent=35 // pred_region
          %s171 = sand.u32 %s53, 1
          %s172 = scalar_lea.sflag [#allocation4], %s171
          %s173 = sand.u32 %s53, 1
          %s174 = smul.addr %s173, 8
          %s175 = scalar_lea.vmem [#allocation5], %s174
          %176 = dma.done %s172, 128
        $region40: #{tpu_custom_call.1} parent=35 // pred_fallthru
          _
      $region36: #{tpu_custom_call.1} parent=5 // pred_fallthru
        _
    $region6: #{tpu_custom_call.1} parent=1 // loop_footer
      %s17 = sadd.s32 1, %s13
    $region7: #{tpu_custom_call.1} parent=1 // loop_footer_branch
      %12 = sbr.rel target = $region3
    $region8: #{tpu_custom_call.1} parent=1 // loop_exit
      _
    %177 = vsyncpa [#allocation3], 1
    %s178 = scalar_lea.sflag [#allocation3], 1
    %179 = vsyncpa %s178, 1
    %180 = vsyncpa [#allocation4], 1
    %s181 = scalar_lea.sflag [#allocation4], 1
    %182 = vsyncpa %s181, 1

</llo_original>
